<compile_context>
chip_gen: v7x
topology: tpu7x:2x2x1
jax: 0.10.0
libtpu: 0.0.40
codegen_flags: <defaults>
</compile_context>

<pallas_src>
import jax
import jax.numpy as jnp
from jax.experimental import pallas as pl
from jax.experimental.pallas import tpu as pltpu

HIDDEN = 128
_NEG_FILL = -1e30  # padded action lanes -> argmax-safe without slicing


def _round_up(a: int, m: int) -> int:
    return (a + m - 1) // m * m


def _choose_tile(batch: int, cap: int = 2048) -> tuple[int, int]:
    """Pick batch tile TB (multiple of 16, <= cap) and padded batch size."""
    b = _round_up(max(batch, 16), 16)
    if b <= 512:
        tb = b  # single grid step; launch/overhead-bound regime
    else:
        # >= 2 grid steps so v7x can shard the batch axis across both TensorCores,
        # while keeping the per-step VMEM footprint bounded by `cap` rows.
        steps = max(2, pl.cdiv(b, cap))
        tb = _round_up(pl.cdiv(b, steps), 16)
    batch_pad = _round_up(batch, tb)
    return tb, batch_pad


def dqn_kernel(x_ref, w1_ref, b1_ref, w2_ref, b2_ref, w3_ref, b3_ref, o_ref):
    # Cast activations to bf16 for the MXU; accumulate in f32.
    x = x_ref[...].astype(jnp.bfloat16)
    # Layer 1: Linear + ReLU
    h1 = jnp.dot(x, w1_ref[...], preferred_element_type=jnp.float32)
    h1 = jnp.maximum(h1 + b1_ref[...], 0.0)
    # Layer 2: Linear + ReLU
    h2 = jnp.dot(h1.astype(jnp.bfloat16), w2_ref[...],
                 preferred_element_type=jnp.float32)
    h2 = jnp.maximum(h2 + b2_ref[...], 0.0)
    # Layer 3: Linear (Q-values). Padded action columns get b3's -1e30 fill.
    q = jnp.dot(h2.astype(jnp.bfloat16), w3_ref[...],
                preferred_element_type=jnp.float32)
    o_ref[...] = (q + b3_ref[...]).astype(o_ref.dtype)


def prepare_params(params):
    """One-time weight prep: bf16 cast + lane-pad of the output layer.

    `params` holds f32 weights stored as (in_features, out_features) and biases
    as (1, out_features). Call once (outside the hot forward loop).
    """
    w1, b1 = params["w1"], params["b1"]
    w2, b2 = params["w2"], params["b2"]
    w3, b3 = params["w3"], params["b3"]
    hidden = w1.shape[1]
    num_actions = w3.shape[1]
    out_pad = _round_up(num_actions, 128)

    w3p = jnp.zeros((hidden, out_pad), jnp.bfloat16).at[:, :num_actions].set(
        w3.astype(jnp.bfloat16))
    # Padded action lanes -> large negative so downstream argmax over the padded
    # buffer is safe even without slicing.
    b3p = jnp.full((1, out_pad), _NEG_FILL, jnp.float32).at[:, :num_actions].set(b3)

    prepped = {
        "w1": w1.astype(jnp.bfloat16), "b1": b1.astype(jnp.float32),
        "w2": w2.astype(jnp.bfloat16), "b2": b2.astype(jnp.float32),
        "w3": w3p, "b3": b3p,
    }
    return prepped, num_actions


def dqn_forward(x, prepped, num_actions, *, tb_cap: int = 2048,
                out_dtype=jnp.bfloat16, return_padded: bool = False):
    """x: (batch, num_inputs) f32. prepped: output of prepare_params().

    Returns Q-values (batch, num_actions) in `out_dtype` (bf16 by default; cast
    outside only if the consumer needs f32). With return_padded=True the raw
    (batch_pad, out_pad) buffer is returned (padded lanes hold -1e30, padded rows
    are garbage) — useful to feed argmax directly with no extra slice kernel.
    """
    w1, b1 = prepped["w1"], prepped["b1"]
    w2, b2 = prepped["w2"], prepped["b2"]
    w3, b3 = prepped["w3"], prepped["b3"]

    batch, num_inputs = x.shape
    hidden = w1.shape[1]
    out_pad = w3.shape[1]

    TB, batch_pad = _choose_tile(batch, tb_cap)
    if batch_pad != batch:
        # Only pad when strictly needed (typical power-of-2 batches skip this op).
        # Padded rows are garbage-in/garbage-out and discarded; no batch reduction
        # happens inside the kernel, so this is safe.
        x = jnp.pad(x, ((0, batch_pad - batch), (0, 0)))

    grid = (batch_pad // TB,)
    resident = lambda shape: pl.BlockSpec(shape, lambda i: (0, 0))

    flops = 2 * batch_pad * (num_inputs * hidden + hidden * hidden + hidden * out_pad)
    bytes_accessed = (
        batch_pad * num_inputs * 4                                        # x (f32)
        + (num_inputs * hidden + hidden * hidden + hidden * out_pad) * 2  # weights bf16
        + (2 * hidden + out_pad) * 4                                      # biases f32
        + batch_pad * out_pad * jnp.dtype(out_dtype).itemsize             # output
    )

    out = pl.pallas_call(
        dqn_kernel,
        out_shape=jax.ShapeDtypeStruct((batch_pad, out_pad), out_dtype),
        grid=grid,
        in_specs=[
            pl.BlockSpec((TB, num_inputs), lambda i: (i, 0)),  # x: tiled over batch
            resident((num_inputs, hidden)),                    # w1 (VMEM-resident)
            resident((1, hidden)),                             # b1
            resident((hidden, hidden)),                        # w2
            resident((1, hidden)),                             # b2
            resident((hidden, out_pad)),                       # w3 (lane-padded)
            resident((1, out_pad)),                            # b3 (lane-padded)
        ],
        out_specs=pl.BlockSpec((TB, out_pad), lambda i: (i, 0)),
        compiler_params=pltpu.CompilerParams(
            dimension_semantics=("parallel",),
            vmem_limit_bytes=16 << 20,
        ),
        cost_estimate=pl.CostEstimate(
            flops=flops, transcendentals=0, bytes_accessed=bytes_accessed),
    )(x, w1, b1, w2, b2, w3, b3)

    if return_padded:
        return out
    return out[:batch, :num_actions]


def init_params(key, num_inputs, num_actions, hidden=HIDDEN):
    """PyTorch-default-like Linear init: U(-1/sqrt(fan_in), 1/sqrt(fan_in)).
    Weights stored as (in_features, out_features)."""
    def linear(key, fan_in, fan_out):
        kw, kb = jax.random.split(key)
        bound = 1.0 / jnp.sqrt(float(fan_in))
        w = jax.random.uniform(kw, (fan_in, fan_out), jnp.float32, -bound, bound)
        b = jax.random.uniform(kb, (1, fan_out), jnp.float32, -bound, bound)
        return w, b

    k1, k2, k3 = jax.random.split(key, 3)
    w1, b1 = linear(k1, num_inputs, hidden)
    w2, b2 = linear(k2, hidden, hidden)
    w3, b3 = linear(k3, hidden, num_actions)
    return {"w1": w1, "b1": b1, "w2": w2, "b2": b2, "w3": w3, "b3": b3}


def dqn_reference(x, params):
    """Pure-JAX reference with matching bf16-in / f32-accumulate arithmetic."""
    bf = jnp.bfloat16
    h = jnp.dot(x.astype(bf), params["w1"].astype(bf),
                preferred_element_type=jnp.float32) + params["b1"]
    h = jnp.maximum(h, 0.0)
    h = jnp.dot(h.astype(bf), params["w2"].astype(bf),
                preferred_element_type=jnp.float32) + params["b2"]
    h = jnp.maximum(h, 0.0)
    return jnp.dot(h.astype(bf), params["w3"].astype(bf),
                   preferred_element_type=jnp.float32) + params["b3"]


if __name__ == "__main__":
    key = jax.random.PRNGKey(0)
    k_param, k_x = jax.random.split(key)

    # Small shapes consistent with a DQN for a control task: state dim 4, 3 actions.
    batch, num_inputs, num_actions = 2, 4, 3

    params = init_params(k_param, num_inputs, num_actions)
    x = jax.random.normal(k_x, (batch, num_inputs), jnp.float32)

    # One-time weight preparation (hoisted out of the per-call path).
    prepped, n_act = prepare_params(params)
    prepped = jax.tree_util.tree_map(jax.block_until_ready, prepped)

    q = dqn_forward(x, prepped, n_act)
    q = jax.block_until_ready(q)

    q_ref = dqn_reference(x, params)
    assert q.shape == (batch, num_actions), q.shape
    assert jnp.allclose(q.astype(jnp.float32), q_ref, atol=2e-2, rtol=2e-2), (q, q_ref)

    # Padded buffer is argmax-safe (padded lanes hold -1e30).
    q_pad = jax.block_until_ready(dqn_forward(x, prepped, n_act, return_padded=True))
    assert jnp.array_equal(jnp.argmax(q_pad[:batch], axis=-1),
                           jnp.argmax(q_ref, axis=-1))

    print("KERNEL_OK")
</pallas_src>

<mosaic_0001>
module attributes {stable_mosaic.version = 11 : i64} {
  func.func @dqn_kernel(%arg0: i32, %arg1: memref<16x4xf32, #tpu.memory_space<vmem>>, %arg2: memref<4x128xbf16, #tpu.memory_space<vmem>>, %arg3: memref<1x128xf32, #tpu.memory_space<vmem>>, %arg4: memref<128x128xbf16, #tpu.memory_space<vmem>>, %arg5: memref<1x128xf32, #tpu.memory_space<vmem>>, %arg6: memref<128x128xbf16, #tpu.memory_space<vmem>>, %arg7: memref<1x128xf32, #tpu.memory_space<vmem>>, %arg8: memref<16x128xbf16, #tpu.memory_space<vmem>>) attributes {dimension_semantics = [#tpu.dimension_semantics<parallel>], iteration_bounds = array<i64: 1>, scalar_prefetch = 0 : i64, scratch_operands = 0 : i64, tpu.core_type = #tpu.core_type<tc>, window_params = [{transform_indices = @transform_0, window_bounds = array<i64: 16, 4>}, {pipeline_mode = #tpu.pipeline_mode<synchronous>, transform_indices = @transform_1, window_bounds = array<i64: 4, 128>}, {pipeline_mode = #tpu.pipeline_mode<synchronous>, transform_indices = @transform_2, window_bounds = array<i64: 1, 128>}, {pipeline_mode = #tpu.pipeline_mode<synchronous>, transform_indices = @transform_3, window_bounds = array<i64: 128, 128>}, {pipeline_mode = #tpu.pipeline_mode<synchronous>, transform_indices = @transform_4, window_bounds = array<i64: 1, 128>}, {pipeline_mode = #tpu.pipeline_mode<synchronous>, transform_indices = @transform_5, window_bounds = array<i64: 128, 128>}, {pipeline_mode = #tpu.pipeline_mode<synchronous>, transform_indices = @transform_6, window_bounds = array<i64: 1, 128>}, {transform_indices = @transform_7, window_bounds = array<i64: 16, 128>}]} {
    %c0 = arith.constant 0 : index
    %c0_0 = arith.constant 0 : index
    %0 = vector.load %arg1[%c0, %c0_0] : memref<16x4xf32, #tpu.memory_space<vmem>>, vector<16x4xf32>
    %1 = arith.truncf %0 : vector<16x4xf32> to vector<16x4xbf16>
    %c0_1 = arith.constant 0 : index
    %c0_2 = arith.constant 0 : index
    %2 = vector.load %arg2[%c0_1, %c0_2] : memref<4x128xbf16, #tpu.memory_space<vmem>>, vector<4x128xbf16>
    %cst = arith.constant dense<0.000000e+00> : vector<16x128xf32>
    %3 = tpu.matmul %1, %2, %cst {dimension_numbers = #tpu.dot_dimension_numbers<[1], [0], [0], [1], [0, 0, 1, 1], [], []>} : vector<16x4xbf16>, vector<4x128xbf16>, vector<16x128xf32> -> vector<16x128xf32>
    %c0_3 = arith.constant 0 : index
    %c0_4 = arith.constant 0 : index
    %4 = vector.load %arg3[%c0_3, %c0_4] : memref<1x128xf32, #tpu.memory_space<vmem>>, vector<1x128xf32>
    %5 = vector.broadcast %4 : vector<1x128xf32> to vector<16x128xf32>
    %6 = arith.addf %3, %5 : vector<16x128xf32>
    %cst_5 = arith.constant 0.000000e+00 : f32
    %7 = vector.broadcast %cst_5 : f32 to vector<16x128xf32>
    %8 = arith.maximumf %6, %7 : vector<16x128xf32>
    %9 = arith.truncf %8 : vector<16x128xf32> to vector<16x128xbf16>
    %c0_6 = arith.constant 0 : index
    %c0_7 = arith.constant 0 : index
    %10 = vector.load %arg4[%c0_6, %c0_7] : memref<128x128xbf16, #tpu.memory_space<vmem>>, vector<128x128xbf16>
    %cst_8 = arith.constant dense<0.000000e+00> : vector<16x128xf32>
    %11 = tpu.matmul %9, %10, %cst_8 {dimension_numbers = #tpu.dot_dimension_numbers<[1], [0], [0], [1], [0, 0, 1, 1], [], []>} : vector<16x128xbf16>, vector<128x128xbf16>, vector<16x128xf32> -> vector<16x128xf32>
    %c0_9 = arith.constant 0 : index
    %c0_10 = arith.constant 0 : index
    %12 = vector.load %arg5[%c0_9, %c0_10] : memref<1x128xf32, #tpu.memory_space<vmem>>, vector<1x128xf32>
    %13 = vector.broadcast %12 : vector<1x128xf32> to vector<16x128xf32>
    %14 = arith.addf %11, %13 : vector<16x128xf32>
    %cst_11 = arith.constant 0.000000e+00 : f32
    %15 = vector.broadcast %cst_11 : f32 to vector<16x128xf32>
    %16 = arith.maximumf %14, %15 : vector<16x128xf32>
    %17 = arith.truncf %16 : vector<16x128xf32> to vector<16x128xbf16>
    %c0_12 = arith.constant 0 : index
    %c0_13 = arith.constant 0 : index
    %18 = vector.load %arg6[%c0_12, %c0_13] : memref<128x128xbf16, #tpu.memory_space<vmem>>, vector<128x128xbf16>
    %cst_14 = arith.constant dense<0.000000e+00> : vector<16x128xf32>
    %19 = tpu.matmul %17, %18, %cst_14 {dimension_numbers = #tpu.dot_dimension_numbers<[1], [0], [0], [1], [0, 0, 1, 1], [], []>} : vector<16x128xbf16>, vector<128x128xbf16>, vector<16x128xf32> -> vector<16x128xf32>
    %c0_15 = arith.constant 0 : index
    %c0_16 = arith.constant 0 : index
    %20 = vector.load %arg7[%c0_15, %c0_16] : memref<1x128xf32, #tpu.memory_space<vmem>>, vector<1x128xf32>
    %21 = vector.broadcast %20 : vector<1x128xf32> to vector<16x128xf32>
    %22 = arith.addf %19, %21 : vector<16x128xf32>
    %23 = arith.truncf %22 : vector<16x128xf32> to vector<16x128xbf16>
    %c0_17 = arith.constant 0 : index
    %c0_18 = arith.constant 0 : index
    %24 = vector.load %arg8[%c0_17, %c0_18] : memref<16x128xbf16, #tpu.memory_space<vmem>>, vector<16x128xbf16>
    tpu.vector_store %arg8[%c0_17, %c0_18], %23 {strides = array<i32>} : memref<16x128xbf16, #tpu.memory_space<vmem>>, vector<16x128xbf16>,
    return
  }
  func.func @transform_0(%arg0: i32) -> (i32, i32) {
    %c0_i32 = arith.constant 0 : i32
    %c0_i32_0 = arith.constant 0 : i32
    return %arg0, %c0_i32 : i32, i32
  }
  func.func @transform_1(%arg0: i32) -> (i32, i32) {
    %c0_i32 = arith.constant 0 : i32
    %c0_i32_0 = arith.constant 0 : i32
    %c0_i32_1 = arith.constant 0 : i32
    return %c0_i32, %c0_i32_0 : i32, i32
  }
  func.func @transform_2(%arg0: i32) -> (i32, i32) {
    %c0_i32 = arith.constant 0 : i32
    %c0_i32_0 = arith.constant 0 : i32
    %c0_i32_1 = arith.constant 0 : i32
    return %c0_i32, %c0_i32_0 : i32, i32
  }
  func.func @transform_3(%arg0: i32) -> (i32, i32) {
    %c0_i32 = arith.constant 0 : i32
    %c0_i32_0 = arith.constant 0 : i32
    %c0_i32_1 = arith.constant 0 : i32
    return %c0_i32, %c0_i32_0 : i32, i32
  }
  func.func @transform_4(%arg0: i32) -> (i32, i32) {
    %c0_i32 = arith.constant 0 : i32
    %c0_i32_0 = arith.constant 0 : i32
    %c0_i32_1 = arith.constant 0 : i32
    return %c0_i32, %c0_i32_0 : i32, i32
  }
  func.func @transform_5(%arg0: i32) -> (i32, i32) {
    %c0_i32 = arith.constant 0 : i32
    %c0_i32_0 = arith.constant 0 : i32
    %c0_i32_1 = arith.constant 0 : i32
    return %c0_i32, %c0_i32_0 : i32, i32
  }
  func.func @transform_6(%arg0: i32) -> (i32, i32) {
    %c0_i32 = arith.constant 0 : i32
    %c0_i32_0 = arith.constant 0 : i32
    %c0_i32_1 = arith.constant 0 : i32
    return %c0_i32, %c0_i32_0 : i32, i32
  }
  func.func @transform_7(%arg0: i32) -> (i32, i32) {
    %c0_i32 = arith.constant 0 : i32
    %c0_i32_0 = arith.constant 0 : i32
    return %arg0, %c0_i32 : i32, i32
  }
}

</mosaic_0001>

<llo_original>
// kernel: tpu_custom_call.1
$region0: #{tpu_custom_call.1}
  #allocation0 [shape = 'u32[]', space=smem, size = 0x4, offset = 0x4, fixed_abs, tag = 'smem constant byte address 0x4 - core index']
  #allocation1 [shape = 'u32[144,128]{1,0:T(1,128)}', space=vmem, size = 0x12000, scoped, tag = 'internal scratch']
  %s0 = inlined_call_operand.vmem [shape: f32[16,4], index: 0, kind: input, shape index: {}]
  %s1 = inlined_call_operand.vmem [shape: bf16[4,128], index: 1, kind: input, shape index: {}]
  %s2 = inlined_call_operand.vmem [shape: f32[1,128], index: 2, kind: input, shape index: {}]
  %s3 = inlined_call_operand.hbm [shape: bf16[128,128], index: 3, kind: input, shape index: {}]
  %s4 = inlined_call_operand.vmem [shape: f32[1,128], index: 4, kind: input, shape index: {}]
  %s5 = inlined_call_operand.hbm [shape: bf16[128,128], index: 5, kind: input, shape index: {}]
  %s6 = inlined_call_operand.vmem [shape: f32[1,128], index: 6, kind: input, shape index: {}]
  %s7 = inlined_call_operand.hbm [shape: bf16[16,128], index: 7, kind: output, shape index: {}]
  %s8 = sld [smem:[#allocation0]]
  $region46: #{tpu_custom_call.1} parent=0
    _
  %s10 = ssub.s32 1, %s8
  %s11 = scalar_select 0, %s10, %s8
  $region1: #{tpu_custom_call.1} parent=0
    #allocation2 [shape = 'u8[32768]{0}', space=vmem, size = 0x8000, scoped, tag = 'input window, operand 3, single buffered']
    #allocation3 [shape = 's32[1]{0}', space=sflag, size = 0x4, scoped, tag = 'scoped memory for tpu_custom_call.1']
    #allocation4 [shape = 's32[1]{0}', space=sflag, size = 0x4, scoped, tag = 'scoped memory for tpu_custom_call.1']
    #allocation5 [shape = 'u8[32768]{0}', space=vmem, size = 0x8000, scoped, tag = 'input window, operand 5, single buffered']
    #allocation6 [shape = 's32[1]{0}', space=sflag, size = 0x4, scoped, tag = 'scoped memory for tpu_custom_call.1']
    #allocation7 [shape = 'u8[4096]{0}', space=vmem, size = 0x1000, scoped, tag = 'output window, operand 0, single buffered']
    %12 = vsyncpa [#allocation3], 0
    %13 = vsyncpa [#allocation6], 0
    %14 = vsyncpa [#allocation4], 0
    // Predicated region
    $region2: #{tpu_custom_call.1} parent=1 // pred_check
      _
    $region3: #{tpu_custom_call.1} parent=1 // pred_check_branch
      %16 = sbr.rel (0) target = $region5
    $region4: #{tpu_custom_call.1} parent=1 // pred_region
      _
    $region5: #{tpu_custom_call.1} parent=1 // pred_fallthru
      _
    // Predicated region
    $region6: #{tpu_custom_call.1} parent=1 // pred_check
      _
    $region7: #{tpu_custom_call.1} parent=1 // pred_check_branch
      %18 = sbr.rel (0) target = $region9
    $region8: #{tpu_custom_call.1} parent=1 // pred_region
      _
    $region9: #{tpu_custom_call.1} parent=1 // pred_fallthru
      _
    // Predicated region
    $region10: #{tpu_custom_call.1} parent=1 // pred_check
      _
    $region11: #{tpu_custom_call.1} parent=1 // pred_check_branch
      %20 = sbr.rel (0) target = $region13
    $region12: #{tpu_custom_call.1} parent=1 // pred_region
      _
    $region13: #{tpu_custom_call.1} parent=1 // pred_fallthru
      _
    // Predicated region
    $region14: #{tpu_custom_call.1} parent=1 // pred_check
      _
    $region15: #{tpu_custom_call.1} parent=1 // pred_check_branch
      %22 = sbr.rel (0) target = $region17
    $region16: #{tpu_custom_call.1} parent=1 // pred_region
      %s24 = ssub.s32 1024, 1024
      %25 = vsyncadd [#allocation3], %s24
      %s26 = sshll.u32 [#allocation2], 4
      %s27 = int_to_ptr.vmem [resolvable:$true] %s26
      %32 = dma.hbm_to_vmem [thread:$0]  %s3, 1024, %s27, [#allocation3], 64, 64, 4
    $region17: #{tpu_custom_call.1} parent=1 // pred_fallthru
      _
    // Predicated region
    $region18: #{tpu_custom_call.1} parent=1 // pred_check
      _
    $region19: #{tpu_custom_call.1} parent=1 // pred_check_branch
      %34 = sbr.rel (0) target = $region21
    $region20: #{tpu_custom_call.1} parent=1 // pred_region
      _
    $region21: #{tpu_custom_call.1} parent=1 // pred_fallthru
      _
    // Predicated region
    $region22: #{tpu_custom_call.1} parent=1 // pred_check
      _
    $region23: #{tpu_custom_call.1} parent=1 // pred_check_branch
      %36 = sbr.rel (0) target = $region25
    $region24: #{tpu_custom_call.1} parent=1 // pred_region
      %s38 = ssub.s32 1024, 1024
      %39 = vsyncadd [#allocation6], %s38
      %s40 = sshll.u32 [#allocation5], 4
      %s41 = int_to_ptr.vmem [resolvable:$true] %s40
      %46 = dma.hbm_to_vmem [thread:$0]  %s5, 1024, %s41, [#allocation6], 64, 64, 4
    $region25: #{tpu_custom_call.1} parent=1 // pred_fallthru
      _
    // Predicated region
    $region26: #{tpu_custom_call.1} parent=1 // pred_check
      _
    $region27: #{tpu_custom_call.1} parent=1 // pred_check_branch
      %48 = sbr.rel (0) target = $region29
    $region28: #{tpu_custom_call.1} parent=1 // pred_region
      _
    $region29: #{tpu_custom_call.1} parent=1 // pred_fallthru
      _
    // Predicated region
    $region30: #{tpu_custom_call.1} parent=1 // pred_check
      _
    $region31: #{tpu_custom_call.1} parent=1 // pred_check_branch
      %50 = sbr.rel (0) target = $region33
    $region32: #{tpu_custom_call.1} parent=1 // pred_region
      %51 = dma.done [#allocation3], 1024
    $region33: #{tpu_custom_call.1} parent=1 // pred_fallthru
      _
    // Predicated region
    $region34: #{tpu_custom_call.1} parent=1 // pred_check
      _
    $region35: #{tpu_custom_call.1} parent=1 // pred_check_branch
      %53 = sbr.rel (0) target = $region37
    $region36: #{tpu_custom_call.1} parent=1 // pred_region
      %54 = dma.done [#allocation6], 1024
    $region37: #{tpu_custom_call.1} parent=1 // pred_fallthru
      _
    %v56 = vld [vmem:[%s0] sm:$0xff]
    %v57 = vld [vmem:[%s0 + $0x8] sm:$0xff]
    %v58 = vpack.c.bf16 %v57, %v56
    %v59 = vld [vmem:[%s1] sm:$0x3]
    %v60 = vld [vmem:[%s2] sm:$0x1]
    %v62 = vlaneseq
    %v63 = vshrl.u32 %v62, 7
    %v64 = vsub.s32 0, %v63
    %v65 = vrot.slane %v60, %v64
    %vm67 = vcmask 31744
    %v69 = vsel %vm67, %v58, 0
    %vm71 = vcmask 1041408
    %v73 = vsel %vm71, %v59, 0
    %75 = vmatprep.subr.bf16.mxu0 0
    %76 = vmatpush1.bf16.msra.mxu0 %v73
    %77 = vmatprep.subr.bf16.mxu0 0
    %78 = vmatpush1.bf16.msra.mxu0 0
    %79 = vmatprep.subr.bf16.mxu0 0
    %80 = vmatpush1.bf16.msra.mxu0 0
    %81 = vmatprep.subr.bf16.mxu0 0
    %82 = vmatpush1.bf16.msra.mxu0 0
    %83 = vmatprep.subr.bf16.mxu0 0
    %84 = vmatpush1.bf16.msra.mxu0 0
    %85 = vmatprep.subr.bf16.mxu0 0
    %86 = vmatpush1.bf16.msra.mxu0 0
    %87 = vmatprep.subr.bf16.mxu0 0
    %88 = vmatpush1.bf16.msra.mxu0 0
    %89 = vmatprep.subr.bf16.mxu0 0
    %90 = vmatpush1.bf16.msra.mxu0 0
    %91 = vmatprep.subr.bf16.mxu0 0
    %92 = vmatpush1.bf16.msra.mxu0 0
    %93 = vmatprep.subr.bf16.mxu0 0
    %94 = vmatpush1.bf16.msra.mxu0 0
    %95 = vmatprep.subr.bf16.mxu0 0
    %96 = vmatpush1.bf16.msra.mxu0 0
    %97 = vmatprep.subr.bf16.mxu0 0
    %98 = vmatpush1.bf16.msra.mxu0 0
    %99 = vmatprep.subr.bf16.mxu0 0
    %100 = vmatpush1.bf16.msra.mxu0 0
    %101 = vmatprep.subr.bf16.mxu0 0
    %102 = vmatpush1.bf16.msra.mxu0 0
    %103 = vmatprep.subr.bf16.mxu0 0
    %104 = vmatpush1.bf16.msra.mxu0 0
    %105 = vmatprep.subr.bf16.mxu0 0
    %106 = vmatpush1.bf16.msra.mxu0 0
    %107 = vmatprep.mubr.bf16.mxu0 0
    %108 = vmatmul.mubr.bf16.gmra.mrb[0].mxu0 %v69
    %v109 = vpop.f32.mrb[0].mxu0
    %v110 = vadd.f32 %v65, %v109
    %v111 = vpop.f32.mrb[0].mxu0
    %v112 = vpop.f32.mrb[0].mxu0
    %v113 = vadd.f32 %v65, %v112
    %v114 = vpop.f32.mrb[0].mxu0
    %115 = vdwg.mxu0
    %v116 = vmax.f32 %v110, 0.0
    %v117 = vmax.f32 %v113, 0.0
    %v118 = vpack.c.bf16 %v117, %v116
    %v119 = vld [vmem:[#allocation2] sm:$0xf]
    %v120 = vld [vmem:[#allocation2 + $0x4] sm:$0xf]
    %v121 = vld [vmem:[#allocation2 + $0x8] sm:$0xf]
    %v122 = vld [vmem:[#allocation2 + $0xc] sm:$0xf]
    %v123 = vld [vmem:[#allocation2 + $0x10] sm:$0xf]
    %v124 = vld [vmem:[#allocation2 + $0x14] sm:$0xf]
    %v125 = vld [vmem:[#allocation2 + $0x18] sm:$0xf]
    %v126 = vld [vmem:[#allocation2 + $0x1c] sm:$0xf]
    %v127 = vld [vmem:[#allocation2 + $0x20] sm:$0xf]
    %v128 = vld [vmem:[#allocation2 + $0x24] sm:$0xf]
    %v129 = vld [vmem:[#allocation2 + $0x28] sm:$0xf]
    %v130 = vld [vmem:[#allocation2 + $0x2c] sm:$0xf]
    %v131 = vld [vmem:[#allocation2 + $0x30] sm:$0xf]
    %v132 = vld [vmem:[#allocation2 + $0x34] sm:$0xf]
    %v133 = vld [vmem:[#allocation2 + $0x38] sm:$0xf]
    %v134 = vld [vmem:[#allocation2 + $0x3c] sm:$0xf]
    %v135 = vld [vmem:[%s4] sm:$0x1]
    %v137 = vlaneseq
    %v138 = vshrl.u32 %v137, 7
    %v139 = vsub.s32 0, %v138
    %v140 = vrot.slane %v135, %v139
    %v158 = vunpack.c.l.b16 %v119
    %v159 = vunpack.c.l.b16 %v120
    %v160 = vunpack.c.l.b16 %v121
    %v161 = vunpack.c.l.b16 %v122
    %v162 = vunpack.c.l.b16 %v123
    %v163 = vunpack.c.l.b16 %v124
    %v164 = vunpack.c.l.b16 %v125
    %v165 = vunpack.c.l.b16 %v126
    %v166 = vunpack.c.l.b16 %v127
    %v167 = vunpack.c.l.b16 %v128
    %v168 = vunpack.c.l.b16 %v129
    %v169 = vunpack.c.l.b16 %v130
    %v170 = vunpack.c.l.b16 %v131
    %v171 = vunpack.c.l.b16 %v132
    %v172 = vunpack.c.l.b16 %v133
    %v173 = vunpack.c.l.b16 %v134
    %v174 = vpack.c.b16 %v159, %v158
    %v175 = vpack.c.b16 %v161, %v160
    %v176 = vpack.c.b16 %v163, %v162
    %v177 = vpack.c.b16 %v165, %v164
    %v178 = vpack.c.b16 %v167, %v166
    %v179 = vpack.c.b16 %v169, %v168
    %v180 = vpack.c.b16 %v171, %v170
    %v181 = vpack.c.b16 %v173, %v172
    %190 = vmatprep.subr.bf16.mxu0 0
    %191 = vmatpush1.bf16.msra.mxu0 %v174
    %192 = vmatprep.subr.bf16.mxu0 0
    %193 = vmatpush1.bf16.msra.mxu0 %v175
    %194 = vmatprep.subr.bf16.mxu0 0
    %195 = vmatpush1.bf16.msra.mxu0 %v176
    %196 = vmatprep.subr.bf16.mxu0 0
    %197 = vmatpush1.bf16.msra.mxu0 %v177
    %198 = vmatprep.subr.bf16.mxu0 0
    %199 = vmatpush1.bf16.msra.mxu0 %v178
    %200 = vmatprep.subr.bf16.mxu0 0
    %201 = vmatpush1.bf16.msra.mxu0 %v179
    %202 = vmatprep.subr.bf16.mxu0 0
    %203 = vmatpush1.bf16.msra.mxu0 %v180
    %204 = vmatprep.subr.bf16.mxu0 0
    %205 = vmatpush1.bf16.msra.mxu0 %v181
    %206 = vmatprep.subr.bf16.mxu0 0
    %207 = vmatpush1.bf16.msra.mxu0 0
    %208 = vmatprep.subr.bf16.mxu0 0
    %209 = vmatpush1.bf16.msra.mxu0 0
    %210 = vmatprep.subr.bf16.mxu0 0
    %211 = vmatpush1.bf16.msra.mxu0 0
    %212 = vmatprep.subr.bf16.mxu0 0
    %213 = vmatpush1.bf16.msra.mxu0 0
    %214 = vmatprep.subr.bf16.mxu0 0
    %215 = vmatpush1.bf16.msra.mxu0 0
    %216 = vmatprep.subr.bf16.mxu0 0
    %217 = vmatpush1.bf16.msra.mxu0 0
    %218 = vmatprep.subr.bf16.mxu0 0
    %219 = vmatpush1.bf16.msra.mxu0 0
    %220 = vmatprep.subr.bf16.mxu0 0
    %221 = vmatpush1.bf16.msra.mxu0 0
    %222 = vmatprep.mubr.bf16.mxu0 0
    %223 = vmatmul.mubr.bf16.gmra.mrb[0].mxu0 %v118
    %v224 = vpop.f32.mrb[0].mxu0
    %v225 = vadd.f32 %v140, %v224
    %v226 = vpop.f32.mrb[0].mxu0
    %v227 = vpop.f32.mrb[0].mxu0
    %v228 = vadd.f32 %v140, %v227
    %v229 = vpop.f32.mrb[0].mxu0
    %230 = vdwg.mxu0
    %v231 = vmax.f32 %v225, 0.0
    %v232 = vmax.f32 %v228, 0.0
    %v233 = vpack.c.bf16 %v232, %v231
    %v234 = vld [vmem:[#allocation5] sm:$0xf]
    %v235 = vld [vmem:[#allocation5 + $0x4] sm:$0xf]
    %v236 = vld [vmem:[#allocation5 + $0x8] sm:$0xf]
    %v237 = vld [vmem:[#allocation5 + $0xc] sm:$0xf]
    %v238 = vld [vmem:[#allocation5 + $0x10] sm:$0xf]
    %v239 = vld [vmem:[#allocation5 + $0x14] sm:$0xf]
    %v240 = vld [vmem:[#allocation5 + $0x18] sm:$0xf]
    %v241 = vld [vmem:[#allocation5 + $0x1c] sm:$0xf]
    %v242 = vld [vmem:[#allocation5 + $0x20] sm:$0xf]
    %v243 = vld [vmem:[#allocation5 + $0x24] sm:$0xf]
    %v244 = vld [vmem:[#allocation5 + $0x28] sm:$0xf]
    %v245 = vld [vmem:[#allocation5 + $0x2c] sm:$0xf]
    %v246 = vld [vmem:[#allocation5 + $0x30] sm:$0xf]
    %v247 = vld [vmem:[#allocation5 + $0x34] sm:$0xf]
    %v248 = vld [vmem:[#allocation5 + $0x38] sm:$0xf]
    %v249 = vld [vmem:[#allocation5 + $0x3c] sm:$0xf]
    %v250 = vld [vmem:[%s6] sm:$0x1]
    %v252 = vlaneseq
    %v253 = vshrl.u32 %v252, 7
    %v254 = vsub.s32 0, %v253
    %v255 = vrot.slane %v250, %v254
    %v273 = vunpack.c.l.b16 %v234
    %v274 = vunpack.c.l.b16 %v235
    %v275 = vunpack.c.l.b16 %v236
    %v276 = vunpack.c.l.b16 %v237
    %v277 = vunpack.c.l.b16 %v238
    %v278 = vunpack.c.l.b16 %v239
    %v279 = vunpack.c.l.b16 %v240
    %v280 = vunpack.c.l.b16 %v241
    %v281 = vunpack.c.l.b16 %v242
    %v282 = vunpack.c.l.b16 %v243
    %v283 = vunpack.c.l.b16 %v244
    %v284 = vunpack.c.l.b16 %v245
    %v285 = vunpack.c.l.b16 %v246
    %v286 = vunpack.c.l.b16 %v247
    %v287 = vunpack.c.l.b16 %v248
    %v288 = vunpack.c.l.b16 %v249
    %v289 = vpack.c.b16 %v274, %v273
    %v290 = vpack.c.b16 %v276, %v275
    %v291 = vpack.c.b16 %v278, %v277
    %v292 = vpack.c.b16 %v280, %v279
    %v293 = vpack.c.b16 %v282, %v281
    %v294 = vpack.c.b16 %v284, %v283
    %v295 = vpack.c.b16 %v286, %v285
    %v296 = vpack.c.b16 %v288, %v287
    %305 = vmatprep.subr.bf16.mxu0 0
    %306 = vmatpush1.bf16.msra.mxu0 %v289
    %307 = vmatprep.subr.bf16.mxu0 0
    %308 = vmatpush1.bf16.msra.mxu0 %v290
    %309 = vmatprep.subr.bf16.mxu0 0
    %310 = vmatpush1.bf16.msra.mxu0 %v291
    %311 = vmatprep.subr.bf16.mxu0 0
    %312 = vmatpush1.bf16.msra.mxu0 %v292
    %313 = vmatprep.subr.bf16.mxu0 0
    %314 = vmatpush1.bf16.msra.mxu0 %v293
    %315 = vmatprep.subr.bf16.mxu0 0
    %316 = vmatpush1.bf16.msra.mxu0 %v294
    %317 = vmatprep.subr.bf16.mxu0 0
    %318 = vmatpush1.bf16.msra.mxu0 %v295
    %319 = vmatprep.subr.bf16.mxu0 0
    %320 = vmatpush1.bf16.msra.mxu0 %v296
    %321 = vmatprep.subr.bf16.mxu0 0
    %322 = vmatpush1.bf16.msra.mxu0 0
    %323 = vmatprep.subr.bf16.mxu0 0
    %324 = vmatpush1.bf16.msra.mxu0 0
    %325 = vmatprep.subr.bf16.mxu0 0
    %326 = vmatpush1.bf16.msra.mxu0 0
    %327 = vmatprep.subr.bf16.mxu0 0
    %328 = vmatpush1.bf16.msra.mxu0 0
    %329 = vmatprep.subr.bf16.mxu0 0
    %330 = vmatpush1.bf16.msra.mxu0 0
    %331 = vmatprep.subr.bf16.mxu0 0
    %332 = vmatpush1.bf16.msra.mxu0 0
    %333 = vmatprep.subr.bf16.mxu0 0
    %334 = vmatpush1.bf16.msra.mxu0 0
    %335 = vmatprep.subr.bf16.mxu0 0
    %336 = vmatpush1.bf16.msra.mxu0 0
    %337 = vmatprep.mubr.bf16.mxu0 0
    %338 = vmatmul.mubr.bf16.gmra.mrb[0].mxu0 %v233
    %v339 = vpop.f32.mrb[0].mxu0
    %v340 = vadd.f32 %v255, %v339
    %v341 = vpop.f32.mrb[0].mxu0
    %v342 = vpop.f32.mrb[0].mxu0
    %v343 = vadd.f32 %v255, %v342
    %v344 = vpop.f32.mrb[0].mxu0
    %345 = vdwg.mxu0
    %v346 = vpack.c.bf16 %v343, %v340
    %v348 = vunpack.c.l.b16 %v346
    %v349 = vunpack.c.h.b16 %v346
    %v350 = vpack.c.b16 %v348, %v348
    %v351 = vpack.c.b16 %v349, %v349
    %354 = vst [vmem:[#allocation7] sm:$0xf] %v350
    %355 = vst [vmem:[#allocation7 + $0x4] sm:$0xf] %v351
    // Predicated region
    $region38: #{tpu_custom_call.1} parent=1 // pred_check
      _
    $region39: #{tpu_custom_call.1} parent=1 // pred_check_branch
      %357 = sbr.rel (0) target = $region41
    $region40: #{tpu_custom_call.1} parent=1 // pred_region
      %s359 = ssub.s32 128, 128
      %360 = vsyncadd [#allocation4], %s359
      %s361 = sshll.u32 [#allocation7], 4
      %s362 = int_to_ptr.vmem [resolvable:$true] %s361
      %367 = dma.vmem_to_hbm [thread:$0]  %s362, 128, %s7, [#allocation4], 64, 64, 4
    $region41: #{tpu_custom_call.1} parent=1 // pred_fallthru
      _
    // Predicated region
    $region42: #{tpu_custom_call.1} parent=1 // pred_check
      _
    $region43: #{tpu_custom_call.1} parent=1 // pred_check_branch
      %369 = sbr.rel (0) target = $region45
    $region44: #{tpu_custom_call.1} parent=1 // pred_region
      %370 = dma.done [#allocation4], 128
    $region45: #{tpu_custom_call.1} parent=1 // pred_fallthru
      _
    %371 = vsyncpa [#allocation3], 1
    %372 = vsyncpa [#allocation6], 1
    %373 = vsyncpa [#allocation4], 1

</llo_original>
